<compile_context>
chip_gen: v7x
topology: tpu7x:2x2x1
jax: 0.10.0
libtpu: 0.0.40
codegen_flags: <defaults>
</compile_context>

<pallas_src>
import jax
import jax.numpy as jnp
from jax.experimental import pallas as pl
from jax.experimental.pallas import tpu as pltpu


# Feature dims after lane-friendly padding.
D_IN = 784        # 28*28
D_H1 = 256        # 240 -> 256 (zero-padded; exact, ReLU(0)=0)
D_H2 = 128        # already lane-sized
D_OUT = 128       # 10 -> 128 (sliced back to 10 in the wrapper)
N_CLASSES = 10
TB_MAX = 1024     # batch tile; ~11 MiB footprint, fits all of v5e/v6e/v7x


def _round_up(n, m):
    return ((n + m - 1) // m) * m


def mlp_kernel(x_ref, w1_ref, b1_ref, w2_ref, b2_ref, w3_ref, b3_ref, o_ref):
    # Cast f32 activations to bf16 in-kernel (hidden under the x DMA).
    x = x_ref[...].astype(w1_ref.dtype)
    # fc1 + bias + ReLU (bf16 MXU operands, f32 accumulation, f32 epilogue)
    h1 = jnp.dot(x, w1_ref[...], preferred_element_type=jnp.float32)
    h1 = jnp.maximum(h1 + b1_ref[...], 0.0)
    # drop1: identity (eval mode)
    # fc2 + bias + ReLU
    h2 = jnp.dot(h1.astype(w2_ref.dtype), w2_ref[...],
                 preferred_element_type=jnp.float32)
    h2 = jnp.maximum(h2 + b2_ref[...], 0.0)
    # drop2: identity (eval mode)
    # fc3 + bias (output zero-padded to 128 lanes -> unmasked lane-dense vst)
    out = jnp.dot(h2.astype(w3_ref.dtype), w3_ref[...],
                  preferred_element_type=jnp.float32)
    o_ref[...] = (out + b3_ref[...]).astype(o_ref.dtype)


def prepare_params(params, compute_dtype=jnp.bfloat16):
    """One-time prep (hoisted out of the forward pass): transpose PyTorch
    (out,in) weights to (in,out), zero-pad to lane-friendly dims, cast the
    matmul operands to bf16. Biases stay f32 (epilogue runs in f32)."""
    w1, b1, w2, b2, w3, b3 = params
    w1p = jnp.pad(w1.T, ((0, 0), (0, D_H1 - w1.shape[0]))).astype(compute_dtype)    # (784, 256)
    b1p = jnp.pad(b1, (0, D_H1 - b1.shape[0])).reshape(1, -1).astype(jnp.float32)   # (1, 256)
    w2p = jnp.pad(w2.T, ((0, D_H1 - w2.shape[1]), (0, 0))).astype(compute_dtype)    # (256, 128)
    b2p = b2.reshape(1, -1).astype(jnp.float32)                                     # (1, 128)
    w3p = jnp.pad(w3.T, ((0, 0), (0, D_OUT - w3.shape[0]))).astype(compute_dtype)   # (128, 128)
    b3p = jnp.pad(b3, (0, D_OUT - b3.shape[0])).reshape(1, -1).astype(jnp.float32)  # (1, 128)
    return (w1p, b1p, w2p, b2p, w3p, b3p)


def mlp_forward(x_nchw, prepared):
    """x_nchw: (B, 1, 28, 28) float32. Returns (B, 10) float32."""
    B = x_nchw.shape[0]
    w1p, b1p, w2p, b2p, w3p, b3p = prepared

    # nn.Flatten -> (B, 784); stays f32 (metadata-only reshape, no HBM pass).
    x = x_nchw.reshape(B, -1)

    # Batch tiling: full-array block for tiny B (exception to the (8,128)
    # rule); otherwise a multiple-of-8 tile sized so the grid has >= 2 steps
    # (lets v7x's two TensorCores split the "parallel" batch axis), capped at
    # TB_MAX.  No padding of x: the partial last block is write-masked.
    if B <= 8:
        tb = B
    else:
        tb = min(TB_MAX, _round_up(pl.cdiv(B, 2), 8))
    grid = (pl.cdiv(B, tb),)

    x_spec = pl.BlockSpec((tb, D_IN), lambda i: (i, 0))
    out_spec = pl.BlockSpec((tb, D_OUT), lambda i: (i, 0))

    # Weights / biases: single block, constant index_map -> DMA'd once,
    # resident in VMEM across all batch tiles.
    def const_spec(arr):
        return pl.BlockSpec(arr.shape, lambda i: (0, 0))

    out = pl.pallas_call(
        mlp_kernel,
        out_shape=jax.ShapeDtypeStruct((B, D_OUT), jnp.bfloat16),
        grid=grid,
        in_specs=[x_spec,
                  const_spec(w1p), const_spec(b1p),
                  const_spec(w2p), const_spec(b2p),
                  const_spec(w3p), const_spec(b3p)],
        out_specs=out_spec,
        compiler_params=pltpu.CompilerParams(
            dimension_semantics=("parallel",),
            vmem_limit_bytes=32 * 1024 * 1024),
    )(x, w1p, b1p, w2p, b2p, w3p, b3p)

    return out[:, :N_CLASSES].astype(jnp.float32)


def init_params(key):
    """Deterministic parameter init mimicking nn.Linear shapes.
    Weights stored in PyTorch convention: (out_features, in_features)."""
    dims = [(240, 784), (128, 240), (10, 128)]
    params = []
    for out_f, in_f in dims:
        kw, kb, key = jax.random.split(key, 3)
        bound = 1.0 / (in_f ** 0.5)
        w = jax.random.uniform(kw, (out_f, in_f), jnp.float32, -bound, bound)
        b = jax.random.uniform(kb, (out_f,), jnp.float32, -bound, bound)
        params += [w, b]
    return tuple(params)


if __name__ == "__main__":
    key = jax.random.PRNGKey(0)
    kx, kp = jax.random.split(key)

    params = init_params(kp)
    prepared = prepare_params(params)   # transpose/pad/cast once, not per call

    # Small MNIST-like batch, NCHW: (2, 1, 28, 28)
    x = jax.random.normal(kx, (2, 1, 28, 28), jnp.float32)

    y = mlp_forward(x, prepared)
    jax.block_until_ready(y)

    # Reference in plain f32 JAX (eval-mode dropout == identity).
    w1, b1, w2, b2, w3, b3 = params
    xr = x.reshape(x.shape[0], -1)
    h = jnp.maximum(xr @ w1.T + b1, 0.0)
    h = jnp.maximum(h @ w2.T + b2, 0.0)
    y_ref = h @ w3.T + b3

    assert y.shape == (2, 10)
    # bf16 matmul operands / bf16 output store (f32 accumulation) -> relaxed
    # tolerance vs the f32 reference.
    assert jnp.allclose(y, y_ref, atol=3e-2, rtol=3e-2), (
        float(jnp.max(jnp.abs(y - y_ref))))

    print("KERNEL_OK")
</pallas_src>

<mosaic_0001>
module attributes {stable_mosaic.version = 11 : i64} {
  func.func @mlp_kernel(%arg0: i32, %arg1: memref<2x784xf32, #tpu.memory_space<vmem>>, %arg2: memref<784x256xbf16, #tpu.memory_space<vmem>>, %arg3: memref<1x256xf32, #tpu.memory_space<vmem>>, %arg4: memref<256x128xbf16, #tpu.memory_space<vmem>>, %arg5: memref<1x128xf32, #tpu.memory_space<vmem>>, %arg6: memref<128x128xbf16, #tpu.memory_space<vmem>>, %arg7: memref<1x128xf32, #tpu.memory_space<vmem>>, %arg8: memref<2x128xbf16, #tpu.memory_space<vmem>>) attributes {dimension_semantics = [#tpu.dimension_semantics<parallel>], iteration_bounds = array<i64: 1>, scalar_prefetch = 0 : i64, scratch_operands = 0 : i64, tpu.core_type = #tpu.core_type<tc>, window_params = [{transform_indices = @transform_0, window_bounds = array<i64: 2, 784>}, {pipeline_mode = #tpu.pipeline_mode<synchronous>, transform_indices = @transform_1, window_bounds = array<i64: 784, 256>}, {pipeline_mode = #tpu.pipeline_mode<synchronous>, transform_indices = @transform_2, window_bounds = array<i64: 1, 256>}, {pipeline_mode = #tpu.pipeline_mode<synchronous>, transform_indices = @transform_3, window_bounds = array<i64: 256, 128>}, {pipeline_mode = #tpu.pipeline_mode<synchronous>, transform_indices = @transform_4, window_bounds = array<i64: 1, 128>}, {pipeline_mode = #tpu.pipeline_mode<synchronous>, transform_indices = @transform_5, window_bounds = array<i64: 128, 128>}, {pipeline_mode = #tpu.pipeline_mode<synchronous>, transform_indices = @transform_6, window_bounds = array<i64: 1, 128>}, {transform_indices = @transform_7, window_bounds = array<i64: 2, 128>}]} {
    %c0 = arith.constant 0 : index
    %c0_0 = arith.constant 0 : index
    %0 = vector.load %arg1[%c0, %c0_0] : memref<2x784xf32, #tpu.memory_space<vmem>>, vector<2x784xf32>
    %1 = arith.truncf %0 : vector<2x784xf32> to vector<2x784xbf16>
    %c0_1 = arith.constant 0 : index
    %c0_2 = arith.constant 0 : index
    %2 = vector.load %arg2[%c0_1, %c0_2] : memref<784x256xbf16, #tpu.memory_space<vmem>>, vector<784x256xbf16>
    %cst = arith.constant dense<0.000000e+00> : vector<2x256xf32>
    %3 = tpu.matmul %1, %2, %cst {dimension_numbers = #tpu.dot_dimension_numbers<[1], [0], [0], [1], [0, 0, 1, 1], [], []>} : vector<2x784xbf16>, vector<784x256xbf16>, vector<2x256xf32> -> vector<2x256xf32>
    %c0_3 = arith.constant 0 : index
    %c0_4 = arith.constant 0 : index
    %4 = vector.load %arg3[%c0_3, %c0_4] : memref<1x256xf32, #tpu.memory_space<vmem>>, vector<1x256xf32>
    %5 = vector.broadcast %4 : vector<1x256xf32> to vector<2x256xf32>
    %6 = arith.addf %3, %5 : vector<2x256xf32>
    %cst_5 = arith.constant 0.000000e+00 : f32
    %7 = vector.broadcast %cst_5 : f32 to vector<2x256xf32>
    %8 = arith.maximumf %6, %7 : vector<2x256xf32>
    %9 = arith.truncf %8 : vector<2x256xf32> to vector<2x256xbf16>
    %c0_6 = arith.constant 0 : index
    %c0_7 = arith.constant 0 : index
    %10 = vector.load %arg4[%c0_6, %c0_7] : memref<256x128xbf16, #tpu.memory_space<vmem>>, vector<256x128xbf16>
    %cst_8 = arith.constant dense<0.000000e+00> : vector<2x128xf32>
    %11 = tpu.matmul %9, %10, %cst_8 {dimension_numbers = #tpu.dot_dimension_numbers<[1], [0], [0], [1], [0, 0, 1, 1], [], []>} : vector<2x256xbf16>, vector<256x128xbf16>, vector<2x128xf32> -> vector<2x128xf32>
    %c0_9 = arith.constant 0 : index
    %c0_10 = arith.constant 0 : index
    %12 = vector.load %arg5[%c0_9, %c0_10] : memref<1x128xf32, #tpu.memory_space<vmem>>, vector<1x128xf32>
    %13 = vector.broadcast %12 : vector<1x128xf32> to vector<2x128xf32>
    %14 = arith.addf %11, %13 : vector<2x128xf32>
    %cst_11 = arith.constant 0.000000e+00 : f32
    %15 = vector.broadcast %cst_11 : f32 to vector<2x128xf32>
    %16 = arith.maximumf %14, %15 : vector<2x128xf32>
    %17 = arith.truncf %16 : vector<2x128xf32> to vector<2x128xbf16>
    %c0_12 = arith.constant 0 : index
    %c0_13 = arith.constant 0 : index
    %18 = vector.load %arg6[%c0_12, %c0_13] : memref<128x128xbf16, #tpu.memory_space<vmem>>, vector<128x128xbf16>
    %cst_14 = arith.constant dense<0.000000e+00> : vector<2x128xf32>
    %19 = tpu.matmul %17, %18, %cst_14 {dimension_numbers = #tpu.dot_dimension_numbers<[1], [0], [0], [1], [0, 0, 1, 1], [], []>} : vector<2x128xbf16>, vector<128x128xbf16>, vector<2x128xf32> -> vector<2x128xf32>
    %c0_15 = arith.constant 0 : index
    %c0_16 = arith.constant 0 : index
    %20 = vector.load %arg7[%c0_15, %c0_16] : memref<1x128xf32, #tpu.memory_space<vmem>>, vector<1x128xf32>
    %21 = vector.broadcast %20 : vector<1x128xf32> to vector<2x128xf32>
    %22 = arith.addf %19, %21 : vector<2x128xf32>
    %23 = arith.truncf %22 : vector<2x128xf32> to vector<2x128xbf16>
    %c0_17 = arith.constant 0 : index
    %c0_18 = arith.constant 0 : index
    %24 = vector.load %arg8[%c0_17, %c0_18] : memref<2x128xbf16, #tpu.memory_space<vmem>>, vector<2x128xbf16>
    tpu.vector_store %arg8[%c0_17, %c0_18], %23 {strides = array<i32>} : memref<2x128xbf16, #tpu.memory_space<vmem>>, vector<2x128xbf16>,
    return
  }
  func.func @transform_0(%arg0: i32) -> (i32, i32) {
    %c0_i32 = arith.constant 0 : i32
    %c0_i32_0 = arith.constant 0 : i32
    return %arg0, %c0_i32 : i32, i32
  }
  func.func @transform_1(%arg0: i32) -> (i32, i32) {
    %c0_i32 = arith.constant 0 : i32
    %c0_i32_0 = arith.constant 0 : i32
    %c0_i32_1 = arith.constant 0 : i32
    return %c0_i32, %c0_i32_0 : i32, i32
  }
  func.func @transform_2(%arg0: i32) -> (i32, i32) {
    %c0_i32 = arith.constant 0 : i32
    %c0_i32_0 = arith.constant 0 : i32
    %c0_i32_1 = arith.constant 0 : i32
    return %c0_i32, %c0_i32_0 : i32, i32
  }
  func.func @transform_3(%arg0: i32) -> (i32, i32) {
    %c0_i32 = arith.constant 0 : i32
    %c0_i32_0 = arith.constant 0 : i32
    %c0_i32_1 = arith.constant 0 : i32
    return %c0_i32, %c0_i32_0 : i32, i32
  }
  func.func @transform_4(%arg0: i32) -> (i32, i32) {
    %c0_i32 = arith.constant 0 : i32
    %c0_i32_0 = arith.constant 0 : i32
    %c0_i32_1 = arith.constant 0 : i32
    return %c0_i32, %c0_i32_0 : i32, i32
  }
  func.func @transform_5(%arg0: i32) -> (i32, i32) {
    %c0_i32 = arith.constant 0 : i32
    %c0_i32_0 = arith.constant 0 : i32
    %c0_i32_1 = arith.constant 0 : i32
    return %c0_i32, %c0_i32_0 : i32, i32
  }
  func.func @transform_6(%arg0: i32) -> (i32, i32) {
    %c0_i32 = arith.constant 0 : i32
    %c0_i32_0 = arith.constant 0 : i32
    %c0_i32_1 = arith.constant 0 : i32
    return %c0_i32, %c0_i32_0 : i32, i32
  }
  func.func @transform_7(%arg0: i32) -> (i32, i32) {
    %c0_i32 = arith.constant 0 : i32
    %c0_i32_0 = arith.constant 0 : i32
    return %arg0, %c0_i32 : i32, i32
  }
}

</mosaic_0001>

<llo_original>
// kernel: tpu_custom_call.1
$region0: #{tpu_custom_call.1}
  #allocation0 [shape = 'u32[]', space=smem, size = 0x4, offset = 0x4, fixed_abs, tag = 'smem constant byte address 0x4 - core index']
  #allocation1 [shape = 'u32[144,128]{1,0:T(1,128)}', space=vmem, size = 0x12000, scoped, tag = 'internal scratch']
  %s0 = inlined_call_operand.hbm [shape: f32[2,784], index: 0, kind: input, shape index: {}]
  %s1 = inlined_call_operand.hbm [shape: bf16[784,256], index: 1, kind: input, shape index: {}]
  %s2 = inlined_call_operand.vmem [shape: f32[1,256], index: 2, kind: input, shape index: {}]
  %s3 = inlined_call_operand.hbm [shape: bf16[256,128], index: 3, kind: input, shape index: {}]
  %s4 = inlined_call_operand.vmem [shape: f32[1,128], index: 4, kind: input, shape index: {}]
  %s5 = inlined_call_operand.hbm [shape: bf16[128,128], index: 5, kind: input, shape index: {}]
  %s6 = inlined_call_operand.vmem [shape: f32[1,128], index: 6, kind: input, shape index: {}]
  %s7 = inlined_call_operand.hbm [shape: bf16[2,128], index: 7, kind: output, shape index: {}]
  %s8 = sld [smem:[#allocation0]]
  $region54: #{tpu_custom_call.1} parent=0
    _
  %s10 = ssub.s32 1, %s8
  %s11 = scalar_select 0, %s10, %s8
  $region1: #{tpu_custom_call.1} parent=0
    #allocation2 [shape = 'u8[7168]{0}', space=vmem, size = 0x1c00, scoped, tag = 'input window, operand 0, single buffered']
    #allocation3 [shape = 's32[1]{0}', space=sflag, size = 0x4, scoped, tag = 'scoped memory for tpu_custom_call.1']
    #allocation4 [shape = 's32[1]{0}', space=sflag, size = 0x4, scoped, tag = 'scoped memory for tpu_custom_call.1']
    #allocation5 [shape = 'u8[401408]{0}', space=vmem, size = 0x62000, scoped, tag = 'input window, operand 1, single buffered']
    #allocation6 [shape = 's32[1]{0}', space=sflag, size = 0x4, scoped, tag = 'scoped memory for tpu_custom_call.1']
    #allocation7 [shape = 'u8[65536]{0}', space=vmem, size = 0x10000, scoped, tag = 'input window, operand 3, single buffered']
    #allocation8 [shape = 'u8[32768]{0}', space=vmem, size = 0x8000, scoped, tag = 'input window, operand 5, single buffered']
    #allocation9 [shape = 's32[1]{0}', space=sflag, size = 0x4, scoped, tag = 'scoped memory for tpu_custom_call.1']
    #allocation10 [shape = 'u8[512]{0}', space=vmem, size = 0x400, scoped, tag = 'output window, operand 0, single buffered']
    %12 = vsyncpa [#allocation3], 0
    %13 = vsyncpa [#allocation6], 0
    %14 = vsyncpa [#allocation9], 0
    %15 = vsyncpa [#allocation4], 0
    // Predicated region
    $region2: #{tpu_custom_call.1} parent=1 // pred_check
      _
    $region3: #{tpu_custom_call.1} parent=1 // pred_check_branch
      %17 = sbr.rel (0) target = $region5
    $region4: #{tpu_custom_call.1} parent=1 // pred_region
      %s19 = ssub.s32 224, 224
      %20 = vsyncadd [#allocation3], %s19
      %s22 = sshll.u32 [#allocation2], 4
      %s23 = int_to_ptr.vmem [resolvable:$true] %s22
      %25 = dma.hbm_to_vmem [thread:$0]  %s0, 224, %s23, [#allocation3]
    $region5: #{tpu_custom_call.1} parent=1 // pred_fallthru
      _
    // Predicated region
    $region6: #{tpu_custom_call.1} parent=1 // pred_check
      _
    $region7: #{tpu_custom_call.1} parent=1 // pred_check_branch
      %27 = sbr.rel (0) target = $region9
    $region8: #{tpu_custom_call.1} parent=1 // pred_region
      %s29 = ssub.s32 12544, 12544
      %30 = vsyncadd [#allocation6], %s29
      %s31 = sshll.u32 [#allocation5], 4
      %s32 = int_to_ptr.vmem [resolvable:$true] %s31
      %37 = dma.hbm_to_vmem [thread:$0]  %s1, 12544, %s32, [#allocation6], 128, 128, 8
    $region9: #{tpu_custom_call.1} parent=1 // pred_fallthru
      _
    // Predicated region
    $region10: #{tpu_custom_call.1} parent=1 // pred_check
      _
    $region11: #{tpu_custom_call.1} parent=1 // pred_check_branch
      %39 = sbr.rel (0) target = $region13
    $region12: #{tpu_custom_call.1} parent=1 // pred_region
      _
    $region13: #{tpu_custom_call.1} parent=1 // pred_fallthru
      _
    // Predicated region
    $region14: #{tpu_custom_call.1} parent=1 // pred_check
      _
    $region15: #{tpu_custom_call.1} parent=1 // pred_check_branch
      %41 = sbr.rel (0) target = $region17
    $region16: #{tpu_custom_call.1} parent=1 // pred_region
      %s43 = ssub.s32 2048, 2048
      %44 = vsyncadd [#allocation6], %s43
      %s45 = sshll.u32 [#allocation7], 4
      %s46 = int_to_ptr.vmem [resolvable:$true] %s45
      %51 = dma.hbm_to_vmem [thread:$0]  %s3, 2048, %s46, [#allocation6], 64, 64, 4
    $region17: #{tpu_custom_call.1} parent=1 // pred_fallthru
      _
    // Predicated region
    $region18: #{tpu_custom_call.1} parent=1 // pred_check
      _
    $region19: #{tpu_custom_call.1} parent=1 // pred_check_branch
      %53 = sbr.rel (0) target = $region21
    $region20: #{tpu_custom_call.1} parent=1 // pred_region
      _
    $region21: #{tpu_custom_call.1} parent=1 // pred_fallthru
      _
    // Predicated region
    $region22: #{tpu_custom_call.1} parent=1 // pred_check
      _
    $region23: #{tpu_custom_call.1} parent=1 // pred_check_branch
      %55 = sbr.rel (0) target = $region25
    $region24: #{tpu_custom_call.1} parent=1 // pred_region
      %s57 = ssub.s32 1024, 1024
      %58 = vsyncadd [#allocation9], %s57
      %s59 = sshll.u32 [#allocation8], 4
      %s60 = int_to_ptr.vmem [resolvable:$true] %s59
      %65 = dma.hbm_to_vmem [thread:$0]  %s5, 1024, %s60, [#allocation9], 64, 64, 4
    $region25: #{tpu_custom_call.1} parent=1 // pred_fallthru
      _
    // Predicated region
    $region26: #{tpu_custom_call.1} parent=1 // pred_check
      _
    $region27: #{tpu_custom_call.1} parent=1 // pred_check_branch
      %67 = sbr.rel (0) target = $region29
    $region28: #{tpu_custom_call.1} parent=1 // pred_region
      _
    $region29: #{tpu_custom_call.1} parent=1 // pred_fallthru
      _
    // Predicated region
    $region30: #{tpu_custom_call.1} parent=1 // pred_check
      _
    $region31: #{tpu_custom_call.1} parent=1 // pred_check_branch
      %69 = sbr.rel (0) target = $region33
    $region32: #{tpu_custom_call.1} parent=1 // pred_region
      %70 = dma.done [#allocation3], 224
    $region33: #{tpu_custom_call.1} parent=1 // pred_fallthru
      _
    // Predicated region
    $region34: #{tpu_custom_call.1} parent=1 // pred_check
      _
    $region35: #{tpu_custom_call.1} parent=1 // pred_check_branch
      %72 = sbr.rel (0) target = $region37
    $region36: #{tpu_custom_call.1} parent=1 // pred_region
      %73 = dma.done [#allocation6], 12544
    $region37: #{tpu_custom_call.1} parent=1 // pred_fallthru
      _
    // Predicated region
    $region38: #{tpu_custom_call.1} parent=1 // pred_check
      _
    $region39: #{tpu_custom_call.1} parent=1 // pred_check_branch
      %75 = sbr.rel (0) target = $region41
    $region40: #{tpu_custom_call.1} parent=1 // pred_region
      %76 = dma.done [#allocation6], 2048
    $region41: #{tpu_custom_call.1} parent=1 // pred_fallthru
      _
    // Predicated region
    $region42: #{tpu_custom_call.1} parent=1 // pred_check
      _
    $region43: #{tpu_custom_call.1} parent=1 // pred_check_branch
      %78 = sbr.rel (0) target = $region45
    $region44: #{tpu_custom_call.1} parent=1 // pred_region
      %79 = dma.done [#allocation9], 1024
    $region45: #{tpu_custom_call.1} parent=1 // pred_fallthru
      _
    %v81 = vld [vmem:[#allocation2] sm:$0xff]
    %v82 = vld [vmem:[#allocation2 + $0x8] sm:$0x3f]
    %v85 = vcombine.high %v81, %v81
    %v87 = vunpack.c.l.s4 1983009808
    %v88 = vunpack.c.0.s8 %v87
    %v89 = vlaneseq
    %v90 = vshrl.u32 %v89, 7
    %v91 = vsub.s32 %v88, %v90
    %v92 = vrot.slane %v81, %v91
    %v94 = vunpack.c.l.s4 1983009808
    %v95 = vunpack.c.0.s8 %v94
    %v96 = vlaneseq
    %v97 = vshrl.u32 %v96, 7
    %v98 = vsub.s32 %v95, %v97
    %v99 = vrot.slane %v85, %v98
    %v100 = vcombine.high %v92, %v92
    %v101 = vcombine.high %v99, %v99
    %v102 = vcombine.high %v82, %v82
    %v104 = vunpack.c.l.s4 1983009808
    %v105 = vunpack.c.0.s8 %v104
    %v106 = vlaneseq
    %v107 = vshrl.u32 %v106, 7
    %v108 = vsub.s32 %v105, %v107
    %v109 = vrot.slane %v82, %v108
    %v111 = vunpack.c.l.s4 1983009808
    %v112 = vunpack.c.0.s8 %v111
    %v113 = vlaneseq
    %v114 = vshrl.u32 %v113, 7
    %v115 = vsub.s32 %v112, %v114
    %v116 = vrot.slane %v102, %v115
    %v117 = vcombine.high %v109, %v109
    %v125 = vpack.c.bf16 %v92, %v92
    %v126 = vpack.c.bf16 %v100, %v100
    %v127 = vpack.c.bf16 %v99, %v99
    %v128 = vpack.c.bf16 %v101, %v101
    %v129 = vpack.c.bf16 %v109, %v109
    %v130 = vpack.c.bf16 %v117, %v117
    %v131 = vpack.c.bf16 %v116, %v116
    %v132 = vld [vmem:[#allocation5] sm:$0xff]
    %v133 = vld [vmem:[#allocation5 + $0x8] sm:$0xff]
    %v134 = vld [vmem:[#allocation5 + $0x10] sm:$0xff]
    %v135 = vld [vmem:[#allocation5 + $0x18] sm:$0xff]
    %v136 = vld [vmem:[#allocation5 + $0x20] sm:$0xff]
    %v137 = vld [vmem:[#allocation5 + $0x28] sm:$0xff]
    %v138 = vld [vmem:[#allocation5 + $0x30] sm:$0xff]
    %v139 = vld [vmem:[#allocation5 + $0x38] sm:$0xff]
    %v140 = vld [vmem:[#allocation5 + $0x40] sm:$0xff]
    %v141 = vld [vmem:[#allocation5 + $0x48] sm:$0xff]
    %v142 = vld [vmem:[#allocation5 + $0x50] sm:$0xff]
    %v143 = vld [vmem:[#allocation5 + $0x58] sm:$0xff]
    %v144 = vld [vmem:[#allocation5 + $0x60] sm:$0xff]
    %v145 = vld [vmem:[#allocation5 + $0x68] sm:$0xff]
    %v146 = vld [vmem:[#allocation5 + $0x70] sm:$0xff]
    %v147 = vld [vmem:[#allocation5 + $0x78] sm:$0xff]
    %v148 = vld [vmem:[#allocation5 + $0x80] sm:$0xff]
    %v149 = vld [vmem:[#allocation5 + $0x88] sm:$0xff]
    %v150 = vld [vmem:[#allocation5 + $0x90] sm:$0xff]
    %v151 = vld [vmem:[#allocation5 + $0x98] sm:$0xff]
    %v152 = vld [vmem:[#allocation5 + $0xa0] sm:$0xff]
    %v153 = vld [vmem:[#allocation5 + $0xa8] sm:$0xff]
    %v154 = vld [vmem:[#allocation5 + $0xb0] sm:$0xff]
    %v155 = vld [vmem:[#allocation5 + $0xb8] sm:$0xff]
    %v156 = vld [vmem:[#allocation5 + $0xc0] sm:$0xff]
    %v157 = vld [vmem:[#allocation5 + $0xc8] sm:$0xff]
    %v158 = vld [vmem:[#allocation5 + $0xd0] sm:$0xff]
    %v159 = vld [vmem:[#allocation5 + $0xd8] sm:$0xff]
    %v160 = vld [vmem:[#allocation5 + $0xe0] sm:$0xff]
    %v161 = vld [vmem:[#allocation5 + $0xe8] sm:$0xff]
    %v162 = vld [vmem:[#allocation5 + $0xf0] sm:$0xff]
    %v163 = vld [vmem:[#allocation5 + $0xf8] sm:$0xff]
    %v164 = vld [vmem:[#allocation5 + $0x100] sm:$0xff]
    %v165 = vld [vmem:[#allocation5 + $0x108] sm:$0xff]
    %v166 = vld [vmem:[#allocation5 + $0x110] sm:$0xff]
    %v167 = vld [vmem:[#allocation5 + $0x118] sm:$0xff]
    %v168 = vld [vmem:[#allocation5 + $0x120] sm:$0xff]
    %v169 = vld [vmem:[#allocation5 + $0x128] sm:$0xff]
    %v170 = vld [vmem:[#allocation5 + $0x130] sm:$0xff]
    %v171 = vld [vmem:[#allocation5 + $0x138] sm:$0xff]
    %v172 = vld [vmem:[#allocation5 + $0x140] sm:$0xff]
    %v173 = vld [vmem:[#allocation5 + $0x148] sm:$0xff]
    %v174 = vld [vmem:[#allocation5 + $0x150] sm:$0xff]
    %v175 = vld [vmem:[#allocation5 + $0x158] sm:$0xff]
    %v176 = vld [vmem:[#allocation5 + $0x160] sm:$0xff]
    %v177 = vld [vmem:[#allocation5 + $0x168] sm:$0xff]
    %v178 = vld [vmem:[#allocation5 + $0x170] sm:$0xff]
    %v179 = vld [vmem:[#allocation5 + $0x178] sm:$0xff]
    %v180 = vld [vmem:[#allocation5 + $0x180] sm:$0xff]
    %v181 = vld [vmem:[#allocation5 + $0x188] sm:$0xff]
    %v182 = vld [vmem:[#allocation5 + $0x190] sm:$0xff]
    %v183 = vld [vmem:[#allocation5 + $0x198] sm:$0xff]
    %v184 = vld [vmem:[#allocation5 + $0x1a0] sm:$0xff]
    %v185 = vld [vmem:[#allocation5 + $0x1a8] sm:$0xff]
    %v186 = vld [vmem:[#allocation5 + $0x1b0] sm:$0xff]
    %v187 = vld [vmem:[#allocation5 + $0x1b8] sm:$0xff]
    %v188 = vld [vmem:[#allocation5 + $0x1c0] sm:$0xff]
    %v189 = vld [vmem:[#allocation5 + $0x1c8] sm:$0xff]
    %v190 = vld [vmem:[#allocation5 + $0x1d0] sm:$0xff]
    %v191 = vld [vmem:[#allocation5 + $0x1d8] sm:$0xff]
    %v192 = vld [vmem:[#allocation5 + $0x1e0] sm:$0xff]
    %v193 = vld [vmem:[#allocation5 + $0x1e8] sm:$0xff]
    %v194 = vld [vmem:[#allocation5 + $0x1f0] sm:$0xff]
    %v195 = vld [vmem:[#allocation5 + $0x1f8] sm:$0xff]
    %v196 = vld [vmem:[#allocation5 + $0x200] sm:$0xff]
    %v197 = vld [vmem:[#allocation5 + $0x208] sm:$0xff]
    %v198 = vld [vmem:[#allocation5 + $0x210] sm:$0xff]
    %v199 = vld [vmem:[#allocation5 + $0x218] sm:$0xff]
    %v200 = vld [vmem:[#allocation5 + $0x220] sm:$0xff]
    %v201 = vld [vmem:[#allocation5 + $0x228] sm:$0xff]
    %v202 = vld [vmem:[#allocation5 + $0x230] sm:$0xff]
    %v203 = vld [vmem:[#allocation5 + $0x238] sm:$0xff]
    %v204 = vld [vmem:[#allocation5 + $0x240] sm:$0xff]
    %v205 = vld [vmem:[#allocation5 + $0x248] sm:$0xff]
    %v206 = vld [vmem:[#allocation5 + $0x250] sm:$0xff]
    %v207 = vld [vmem:[#allocation5 + $0x258] sm:$0xff]
    %v208 = vld [vmem:[#allocation5 + $0x260] sm:$0xff]
    %v209 = vld [vmem:[#allocation5 + $0x268] sm:$0xff]
    %v210 = vld [vmem:[#allocation5 + $0x270] sm:$0xff]
    %v211 = vld [vmem:[#allocation5 + $0x278] sm:$0xff]
    %v212 = vld [vmem:[#allocation5 + $0x280] sm:$0xff]
    %v213 = vld [vmem:[#allocation5 + $0x288] sm:$0xff]
    %v214 = vld [vmem:[#allocation5 + $0x290] sm:$0xff]
    %v215 = vld [vmem:[#allocation5 + $0x298] sm:$0xff]
    %v216 = vld [vmem:[#allocation5 + $0x2a0] sm:$0xff]
    %v217 = vld [vmem:[#allocation5 + $0x2a8] sm:$0xff]
    %v218 = vld [vmem:[#allocation5 + $0x2b0] sm:$0xff]
    %v219 = vld [vmem:[#allocation5 + $0x2b8] sm:$0xff]
    %v220 = vld [vmem:[#allocation5 + $0x2c0] sm:$0xff]
    %v221 = vld [vmem:[#allocation5 + $0x2c8] sm:$0xff]
    %v222 = vld [vmem:[#allocation5 + $0x2d0] sm:$0xff]
    %v223 = vld [vmem:[#allocation5 + $0x2d8] sm:$0xff]
    %v224 = vld [vmem:[#allocation5 + $0x2e0] sm:$0xff]
    %v225 = vld [vmem:[#allocation5 + $0x2e8] sm:$0xff]
    %v226 = vld [vmem:[#allocation5 + $0x2f0] sm:$0xff]
    %v227 = vld [vmem:[#allocation5 + $0x2f8] sm:$0xff]
    %v228 = vld [vmem:[#allocation5 + $0x300] sm:$0xff]
    %v229 = vld [vmem:[#allocation5 + $0x308] sm:$0xff]
    %v230 = vld [vmem:[%s2] sm:$0x3]
    %v232 = vlaneseq
    %v233 = vshrl.u32 %v232, 7
    %v234 = vsub.s32 0, %v233
    %v235 = vrot.slane %v230, %v234
    %v236 = vlaneseq
    %v237 = vshrl.u32 %v236, 7
    %v238 = vsub.s32 1, %v237
    %v239 = vrot.slane %v230, %v238
    %v340 = vunpack.c.l.b16 %v132
    %v341 = vunpack.c.h.b16 %v132
    %v342 = vunpack.c.l.b16 %v133
    %v343 = vunpack.c.h.b16 %v133
    %v344 = vunpack.c.l.b16 %v134
    %v345 = vunpack.c.h.b16 %v134
    %v346 = vunpack.c.l.b16 %v135
    %v347 = vunpack.c.h.b16 %v135
    %v348 = vunpack.c.l.b16 %v136
    %v349 = vunpack.c.h.b16 %v136
    %v350 = vunpack.c.l.b16 %v137
    %v351 = vunpack.c.h.b16 %v137
    %v352 = vunpack.c.l.b16 %v138
    %v353 = vunpack.c.h.b16 %v138
    %v354 = vunpack.c.l.b16 %v139
    %v355 = vunpack.c.h.b16 %v139
    %v356 = vunpack.c.l.b16 %v140
    %v357 = vunpack.c.h.b16 %v140
    %v358 = vunpack.c.l.b16 %v141
    %v359 = vunpack.c.h.b16 %v141
    %v360 = vunpack.c.l.b16 %v142
    %v361 = vunpack.c.h.b16 %v142
    %v362 = vunpack.c.l.b16 %v143
    %v363 = vunpack.c.h.b16 %v143
    %v364 = vunpack.c.l.b16 %v144
    %v365 = vunpack.c.h.b16 %v144
    %v366 = vunpack.c.l.b16 %v145
    %v367 = vunpack.c.h.b16 %v145
    %v368 = vunpack.c.l.b16 %v146
    %v369 = vunpack.c.h.b16 %v146
    %v370 = vunpack.c.l.b16 %v147
    %v371 = vunpack.c.h.b16 %v147
    %v372 = vunpack.c.l.b16 %v148
    %v373 = vunpack.c.h.b16 %v148
    %v374 = vunpack.c.l.b16 %v149
    %v375 = vunpack.c.h.b16 %v149
    %v376 = vunpack.c.l.b16 %v150
    %v377 = vunpack.c.h.b16 %v150
    %v378 = vunpack.c.l.b16 %v151
    %v379 = vunpack.c.h.b16 %v151
    %v380 = vunpack.c.l.b16 %v152
    %v381 = vunpack.c.h.b16 %v152
    %v382 = vunpack.c.l.b16 %v153
    %v383 = vunpack.c.h.b16 %v153
    %v384 = vunpack.c.l.b16 %v154
    %v385 = vunpack.c.h.b16 %v154
    %v386 = vunpack.c.l.b16 %v155
    %v387 = vunpack.c.h.b16 %v155
    %v388 = vunpack.c.l.b16 %v156
    %v389 = vunpack.c.h.b16 %v156
    %v390 = vunpack.c.l.b16 %v157
    %v391 = vunpack.c.h.b16 %v157
    %v392 = vunpack.c.l.b16 %v158
    %v393 = vunpack.c.h.b16 %v158
    %v394 = vunpack.c.l.b16 %v159
    %v395 = vunpack.c.h.b16 %v159
    %v396 = vunpack.c.l.b16 %v160
    %v397 = vunpack.c.h.b16 %v160
    %v398 = vunpack.c.l.b16 %v161
    %v399 = vunpack.c.h.b16 %v161
    %v400 = vunpack.c.l.b16 %v162
    %v401 = vunpack.c.h.b16 %v162
    %v402 = vunpack.c.l.b16 %v163
    %v403 = vunpack.c.h.b16 %v163
    %v404 = vunpack.c.l.b16 %v164
    %v405 = vunpack.c.h.b16 %v164
    %v406 = vunpack.c.l.b16 %v165
    %v407 = vunpack.c.h.b16 %v165
    %v408 = vunpack.c.l.b16 %v166
    %v409 = vunpack.c.h.b16 %v166
    %v410 = vunpack.c.l.b16 %v167
    %v411 = vunpack.c.h.b16 %v167
    %v412 = vunpack.c.l.b16 %v168
    %v413 = vunpack.c.h.b16 %v168
    %v414 = vunpack.c.l.b16 %v169
    %v415 = vunpack.c.h.b16 %v169
    %v416 = vunpack.c.l.b16 %v170
    %v417 = vunpack.c.h.b16 %v170
    %v418 = vunpack.c.l.b16 %v171
    %v419 = vunpack.c.h.b16 %v171
    %v420 = vunpack.c.l.b16 %v172
    %v421 = vunpack.c.h.b16 %v172
    %v422 = vunpack.c.l.b16 %v173
    %v423 = vunpack.c.h.b16 %v173
    %v424 = vunpack.c.l.b16 %v174
    %v425 = vunpack.c.h.b16 %v174
    %v426 = vunpack.c.l.b16 %v175
    %v427 = vunpack.c.h.b16 %v175
    %v428 = vunpack.c.l.b16 %v176
    %v429 = vunpack.c.h.b16 %v176
    %v430 = vunpack.c.l.b16 %v177
    %v431 = vunpack.c.h.b16 %v177
    %v432 = vunpack.c.l.b16 %v178
    %v433 = vunpack.c.h.b16 %v178
    %v434 = vunpack.c.l.b16 %v179
    %v435 = vunpack.c.h.b16 %v179
    %v436 = vunpack.c.l.b16 %v180
    %v437 = vunpack.c.h.b16 %v180
    %v438 = vunpack.c.l.b16 %v181
    %v439 = vunpack.c.h.b16 %v181
    %v440 = vunpack.c.l.b16 %v182
    %v441 = vunpack.c.h.b16 %v182
    %v442 = vunpack.c.l.b16 %v183
    %v443 = vunpack.c.h.b16 %v183
    %v444 = vunpack.c.l.b16 %v184
    %v445 = vunpack.c.h.b16 %v184
    %v446 = vunpack.c.l.b16 %v185
    %v447 = vunpack.c.h.b16 %v185
    %v448 = vunpack.c.l.b16 %v186
    %v449 = vunpack.c.h.b16 %v186
    %v450 = vunpack.c.l.b16 %v187
    %v451 = vunpack.c.h.b16 %v187
    %v452 = vunpack.c.l.b16 %v188
    %v453 = vunpack.c.h.b16 %v188
    %v454 = vunpack.c.l.b16 %v189
    %v455 = vunpack.c.h.b16 %v189
    %v456 = vunpack.c.l.b16 %v190
    %v457 = vunpack.c.h.b16 %v190
    %v458 = vunpack.c.l.b16 %v191
    %v459 = vunpack.c.h.b16 %v191
    %v460 = vunpack.c.l.b16 %v192
    %v461 = vunpack.c.h.b16 %v192
    %v462 = vunpack.c.l.b16 %v193
    %v463 = vunpack.c.h.b16 %v193
    %v464 = vunpack.c.l.b16 %v194
    %v465 = vunpack.c.h.b16 %v194
    %v466 = vunpack.c.l.b16 %v195
    %v467 = vunpack.c.h.b16 %v195
    %v468 = vunpack.c.l.b16 %v196
    %v469 = vunpack.c.h.b16 %v196
    %v470 = vunpack.c.l.b16 %v197
    %v471 = vunpack.c.h.b16 %v197
    %v472 = vunpack.c.l.b16 %v198
    %v473 = vunpack.c.h.b16 %v198
    %v474 = vunpack.c.l.b16 %v199
    %v475 = vunpack.c.h.b16 %v199
    %v476 = vunpack.c.l.b16 %v200
    %v477 = vunpack.c.h.b16 %v200
    %v478 = vunpack.c.l.b16 %v201
    %v479 = vunpack.c.h.b16 %v201
    %v480 = vunpack.c.l.b16 %v202
    %v481 = vunpack.c.h.b16 %v202
    %v482 = vunpack.c.l.b16 %v203
    %v483 = vunpack.c.h.b16 %v203
    %v484 = vunpack.c.l.b16 %v204
    %v485 = vunpack.c.h.b16 %v204
    %v486 = vunpack.c.l.b16 %v205
    %v487 = vunpack.c.h.b16 %v205
    %v488 = vunpack.c.l.b16 %v206
    %v489 = vunpack.c.h.b16 %v206
    %v490 = vunpack.c.l.b16 %v207
    %v491 = vunpack.c.h.b16 %v207
    %v492 = vunpack.c.l.b16 %v208
    %v493 = vunpack.c.h.b16 %v208
    %v494 = vunpack.c.l.b16 %v209
    %v495 = vunpack.c.h.b16 %v209
    %v496 = vunpack.c.l.b16 %v210
    %v497 = vunpack.c.h.b16 %v210
    %v498 = vunpack.c.l.b16 %v211
    %v499 = vunpack.c.h.b16 %v211
    %v500 = vunpack.c.l.b16 %v212
    %v501 = vunpack.c.h.b16 %v212
    %v502 = vunpack.c.l.b16 %v213
    %v503 = vunpack.c.h.b16 %v213
    %v504 = vunpack.c.l.b16 %v214
    %v505 = vunpack.c.h.b16 %v214
    %v506 = vunpack.c.l.b16 %v215
    %v507 = vunpack.c.h.b16 %v215
    %v508 = vunpack.c.l.b16 %v216
    %v509 = vunpack.c.h.b16 %v216
    %v510 = vunpack.c.l.b16 %v217
    %v511 = vunpack.c.h.b16 %v217
    %v512 = vunpack.c.l.b16 %v218
    %v513 = vunpack.c.h.b16 %v218
    %v514 = vunpack.c.l.b16 %v219
    %v515 = vunpack.c.h.b16 %v219
    %v516 = vunpack.c.l.b16 %v220
    %v517 = vunpack.c.h.b16 %v220
    %v518 = vunpack.c.l.b16 %v221
    %v519 = vunpack.c.h.b16 %v221
    %v520 = vunpack.c.l.b16 %v222
    %v521 = vunpack.c.h.b16 %v222
    %v522 = vunpack.c.l.b16 %v223
    %v523 = vunpack.c.h.b16 %v223
    %v524 = vunpack.c.l.b16 %v224
    %v525 = vunpack.c.h.b16 %v224
    %v526 = vunpack.c.l.b16 %v225
    %v527 = vunpack.c.h.b16 %v225
    %v528 = vunpack.c.l.b16 %v226
    %v529 = vunpack.c.h.b16 %v226
    %v530 = vunpack.c.l.b16 %v227
    %v531 = vunpack.c.h.b16 %v227
    %v532 = vunpack.c.l.b16 %v228
    %v533 = vunpack.c.h.b16 %v228
    %v534 = vunpack.c.l.b16 %v229
    %v535 = vunpack.c.h.b16 %v229
    %v536 = vpack.c.b16 %v342, %v340
    %v537 = vpack.c.b16 %v343, %v341
    %v538 = vpack.c.b16 %v346, %v344
    %v539 = vpack.c.b16 %v347, %v345
    %v540 = vpack.c.b16 %v350, %v348
    %v541 = vpack.c.b16 %v351, %v349
    %v542 = vpack.c.b16 %v354, %v352
    %v543 = vpack.c.b16 %v355, %v353
    %v544 = vpack.c.b16 %v358, %v356
    %v545 = vpack.c.b16 %v359, %v357
    %v546 = vpack.c.b16 %v362, %v360
    %v547 = vpack.c.b16 %v363, %v361
    %v548 = vpack.c.b16 %v366, %v364
    %v549 = vpack.c.b16 %v367, %v365
    %v550 = vpack.c.b16 %v370, %v368
    %v551 = vpack.c.b16 %v371, %v369
    %v552 = vpack.c.b16 %v374, %v372
    %v553 = vpack.c.b16 %v375, %v373
    %v554 = vpack.c.b16 %v378, %v376
    %v555 = vpack.c.b16 %v379, %v377
    %v556 = vpack.c.b16 %v382, %v380
    %v557 = vpack.c.b16 %v383, %v381
    %v558 = vpack.c.b16 %v386, %v384
    %v559 = vpack.c.b16 %v387, %v385
    %v560 = vpack.c.b16 %v390, %v388
    %v561 = vpack.c.b16 %v391, %v389
    %v562 = vpack.c.b16 %v394, %v392
    %v563 = vpack.c.b16 %v395, %v393
    %v564 = vpack.c.b16 %v398, %v396
    %v565 = vpack.c.b16 %v399, %v397
    %v566 = vpack.c.b16 %v402, %v400
    %v567 = vpack.c.b16 %v403, %v401
    %v568 = vpack.c.b16 %v406, %v404
    %v569 = vpack.c.b16 %v407, %v405
    %v570 = vpack.c.b16 %v410, %v408
    %v571 = vpack.c.b16 %v411, %v409
    %v572 = vpack.c.b16 %v414, %v412
    %v573 = vpack.c.b16 %v415, %v413
    %v574 = vpack.c.b16 %v418, %v416
    %v575 = vpack.c.b16 %v419, %v417
    %v576 = vpack.c.b16 %v422, %v420
    %v577 = vpack.c.b16 %v423, %v421
    %v578 = vpack.c.b16 %v426, %v424
    %v579 = vpack.c.b16 %v427, %v425
    %v580 = vpack.c.b16 %v430, %v428
    %v581 = vpack.c.b16 %v431, %v429
    %v582 = vpack.c.b16 %v434, %v432
    %v583 = vpack.c.b16 %v435, %v433
    %v584 = vpack.c.b16 %v438, %v436
    %v585 = vpack.c.b16 %v439, %v437
    %v586 = vpack.c.b16 %v442, %v440
    %v587 = vpack.c.b16 %v443, %v441
    %v588 = vpack.c.b16 %v446, %v444
    %v589 = vpack.c.b16 %v447, %v445
    %v590 = vpack.c.b16 %v450, %v448
    %v591 = vpack.c.b16 %v451, %v449
    %v592 = vpack.c.b16 %v454, %v452
    %v593 = vpack.c.b16 %v455, %v453
    %v594 = vpack.c.b16 %v458, %v456
    %v595 = vpack.c.b16 %v459, %v457
    %v596 = vpack.c.b16 %v462, %v460
    %v597 = vpack.c.b16 %v463, %v461
    %v598 = vpack.c.b16 %v466, %v464
    %v599 = vpack.c.b16 %v467, %v465
    %v600 = vpack.c.b16 %v470, %v468
    %v601 = vpack.c.b16 %v471, %v469
    %v602 = vpack.c.b16 %v474, %v472
    %v603 = vpack.c.b16 %v475, %v473
    %v604 = vpack.c.b16 %v478, %v476
    %v605 = vpack.c.b16 %v479, %v477
    %v606 = vpack.c.b16 %v482, %v480
    %v607 = vpack.c.b16 %v483, %v481
    %v608 = vpack.c.b16 %v486, %v484
    %v609 = vpack.c.b16 %v487, %v485
    %v610 = vpack.c.b16 %v490, %v488
    %v611 = vpack.c.b16 %v491, %v489
    %v612 = vpack.c.b16 %v494, %v492
    %v613 = vpack.c.b16 %v495, %v493
    %v614 = vpack.c.b16 %v498, %v496
    %v615 = vpack.c.b16 %v499, %v497
    %v616 = vpack.c.b16 %v502, %v500
    %v617 = vpack.c.b16 %v503, %v501
    %v618 = vpack.c.b16 %v506, %v504
    %v619 = vpack.c.b16 %v507, %v505
    %v620 = vpack.c.b16 %v510, %v508
    %v621 = vpack.c.b16 %v511, %v509
    %v622 = vpack.c.b16 %v514, %v512
    %v623 = vpack.c.b16 %v515, %v513
    %v624 = vpack.c.b16 %v518, %v516
    %v625 = vpack.c.b16 %v519, %v517
    %v626 = vpack.c.b16 %v522, %v520
    %v627 = vpack.c.b16 %v523, %v521
    %v628 = vpack.c.b16 %v526, %v524
    %v629 = vpack.c.b16 %v527, %v525
    %v630 = vpack.c.b16 %v530, %v528
    %v631 = vpack.c.b16 %v531, %v529
    %v632 = vpack.c.b16 %v534, %v532
    %v633 = vpack.c.b16 %v535, %v533
    %vm732 = vcmask 130048
    %v734 = vsel %vm732, %v131, 0
    %736 = vmatprep.subr.bf16.mxu0 %v537
    %737 = vmatpush1.bf16.msra.mxu0 %v536
    %738 = vmatprep.subr.bf16.mxu0 %v539
    %739 = vmatpush1.bf16.msra.mxu0 %v538
    %740 = vmatprep.subr.bf16.mxu0 %v541
    %741 = vmatpush1.bf16.msra.mxu0 %v540
    %742 = vmatprep.subr.bf16.mxu0 %v543
    %743 = vmatpush1.bf16.msra.mxu0 %v542
    %744 = vmatprep.subr.bf16.mxu0 %v545
    %745 = vmatpush1.bf16.msra.mxu0 %v544
    %746 = vmatprep.subr.bf16.mxu0 %v547
    %747 = vmatpush1.bf16.msra.mxu0 %v546
    %748 = vmatprep.subr.bf16.mxu0 %v549
    %749 = vmatpush1.bf16.msra.mxu0 %v548
    %750 = vmatprep.subr.bf16.mxu0 %v551
    %751 = vmatpush1.bf16.msra.mxu0 %v550
    %752 = vmatprep.subr.bf16.mxu0 %v553
    %753 = vmatpush1.bf16.msra.mxu0 %v552
    %754 = vmatprep.subr.bf16.mxu0 %v555
    %755 = vmatpush1.bf16.msra.mxu0 %v554
    %756 = vmatprep.subr.bf16.mxu0 %v557
    %757 = vmatpush1.bf16.msra.mxu0 %v556
    %758 = vmatprep.subr.bf16.mxu0 %v559
    %759 = vmatpush1.bf16.msra.mxu0 %v558
    %760 = vmatprep.subr.bf16.mxu0 %v561
    %761 = vmatpush1.bf16.msra.mxu0 %v560
    %762 = vmatprep.subr.bf16.mxu0 %v563
    %763 = vmatpush1.bf16.msra.mxu0 %v562
    %764 = vmatprep.subr.bf16.mxu0 %v565
    %765 = vmatpush1.bf16.msra.mxu0 %v564
    %766 = vmatprep.subr.bf16.mxu0 %v567
    %767 = vmatpush1.bf16.msra.mxu0 %v566
    %768 = vmatprep.mubr.bf16.mxu0 %v126
    %769 = vmatmul.mubr.bf16.gmra.mrb[0].mxu0 %v125
    %v770 = vpop.f32.mrb[0].mxu0
    %v771 = vadd.f32 %v235, %v770
    %v772 = vpop.f32.mrb[0].mxu0
    %v773 = vadd.f32 %v239, %v772
    %v774 = vpop.f32.mrb[0].mxu0
    %v775 = vpop.f32.mrb[0].mxu0
    %776 = vdwg.mxu0
    %777 = vmatprep.subr.bf16.mxu0 %v569
    %778 = vmatpush1.bf16.msra.mxu0 %v568
    %779 = vmatprep.subr.bf16.mxu0 %v571
    %780 = vmatpush1.bf16.msra.mxu0 %v570
    %781 = vmatprep.subr.bf16.mxu0 %v573
    %782 = vmatpush1.bf16.msra.mxu0 %v572
    %783 = vmatprep.subr.bf16.mxu0 %v575
    %784 = vmatpush1.bf16.msra.mxu0 %v574
    %785 = vmatprep.subr.bf16.mxu0 %v577
    %786 = vmatpush1.bf16.msra.mxu0 %v576
    %787 = vmatprep.subr.bf16.mxu0 %v579
    %788 = vmatpush1.bf16.msra.mxu0 %v578
    %789 = vmatprep.subr.bf16.mxu0 %v581
    %790 = vmatpush1.bf16.msra.mxu0 %v580
    %791 = vmatprep.subr.bf16.mxu0 %v583
    %792 = vmatpush1.bf16.msra.mxu0 %v582
    %793 = vmatprep.subr.bf16.mxu0 %v585
    %794 = vmatpush1.bf16.msra.mxu0 %v584
    %795 = vmatprep.subr.bf16.mxu0 %v587
    %796 = vmatpush1.bf16.msra.mxu0 %v586
    %797 = vmatprep.subr.bf16.mxu0 %v589
    %798 = vmatpush1.bf16.msra.mxu0 %v588
    %799 = vmatprep.subr.bf16.mxu0 %v591
    %800 = vmatpush1.bf16.msra.mxu0 %v590
    %801 = vmatprep.subr.bf16.mxu0 %v593
    %802 = vmatpush1.bf16.msra.mxu0 %v592
    %803 = vmatprep.subr.bf16.mxu0 %v595
    %804 = vmatpush1.bf16.msra.mxu0 %v594
    %805 = vmatprep.subr.bf16.mxu0 %v597
    %806 = vmatpush1.bf16.msra.mxu0 %v596
    %807 = vmatprep.subr.bf16.mxu0 %v599
    %808 = vmatpush1.bf16.msra.mxu0 %v598
    %809 = vmatprep.mubr.bf16.mxu0 %v128
    %810 = vmatmul.mubr.bf16.gmra.mrb[0].mxu0 %v127
    %v811 = vpop.f32.mrb[0].mxu0
    %v812 = vadd.f32 %v771, %v811
    %v813 = vpop.f32.mrb[0].mxu0
    %v814 = vadd.f32 %v773, %v813
    %v815 = vpop.f32.mrb[0].mxu0
    %v816 = vpop.f32.mrb[0].mxu0
    %817 = vdwg.mxu0
    %818 = vmatprep.subr.bf16.mxu0 %v601
    %819 = vmatpush1.bf16.msra.mxu0 %v600
    %820 = vmatprep.subr.bf16.mxu0 %v603
    %821 = vmatpush1.bf16.msra.mxu0 %v602
    %822 = vmatprep.subr.bf16.mxu0 %v605
    %823 = vmatpush1.bf16.msra.mxu0 %v604
    %824 = vmatprep.subr.bf16.mxu0 %v607
    %825 = vmatpush1.bf16.msra.mxu0 %v606
    %826 = vmatprep.subr.bf16.mxu0 %v609
    %827 = vmatpush1.bf16.msra.mxu0 %v608
    %828 = vmatprep.subr.bf16.mxu0 %v611
    %829 = vmatpush1.bf16.msra.mxu0 %v610
    %830 = vmatprep.subr.bf16.mxu0 %v613
    %831 = vmatpush1.bf16.msra.mxu0 %v612
    %832 = vmatprep.subr.bf16.mxu0 %v615
    %833 = vmatpush1.bf16.msra.mxu0 %v614
    %834 = vmatprep.subr.bf16.mxu0 %v617
    %835 = vmatpush1.bf16.msra.mxu0 %v616
    %836 = vmatprep.subr.bf16.mxu0 %v619
    %837 = vmatpush1.bf16.msra.mxu0 %v618
    %838 = vmatprep.subr.bf16.mxu0 %v621
    %839 = vmatpush1.bf16.msra.mxu0 %v620
    %840 = vmatprep.subr.bf16.mxu0 %v623
    %841 = vmatpush1.bf16.msra.mxu0 %v622
    %842 = vmatprep.subr.bf16.mxu0 %v625
    %843 = vmatpush1.bf16.msra.mxu0 %v624
    %844 = vmatprep.subr.bf16.mxu0 %v627
    %845 = vmatpush1.bf16.msra.mxu0 %v626
    %846 = vmatprep.subr.bf16.mxu0 %v629
    %847 = vmatpush1.bf16.msra.mxu0 %v628
    %848 = vmatprep.subr.bf16.mxu0 %v631
    %849 = vmatpush1.bf16.msra.mxu0 %v630
    %850 = vmatprep.mubr.bf16.mxu0 %v130
    %851 = vmatmul.mubr.bf16.gmra.mrb[0].mxu0 %v129
    %v852 = vpop.f32.mrb[0].mxu0
    %v853 = vadd.f32 %v812, %v852
    %v854 = vpop.f32.mrb[0].mxu0
    %v855 = vadd.f32 %v814, %v854
    %v856 = vpop.f32.mrb[0].mxu0
    %v857 = vpop.f32.mrb[0].mxu0
    %858 = vdwg.mxu0
    %859 = vmatprep.subr.bf16.mxu0 %v633
    %860 = vmatpush1.bf16.msra.mxu0 %v632
    %861 = vmatprep.subr.bf16.mxu0 0
    %862 = vmatpush1.bf16.msra.mxu0 0
    %863 = vmatprep.subr.bf16.mxu0 0
    %864 = vmatpush1.bf16.msra.mxu0 0
    %865 = vmatprep.subr.bf16.mxu0 0
    %866 = vmatpush1.bf16.msra.mxu0 0
    %867 = vmatprep.subr.bf16.mxu0 0
    %868 = vmatpush1.bf16.msra.mxu0 0
    %869 = vmatprep.subr.bf16.mxu0 0
    %870 = vmatpush1.bf16.msra.mxu0 0
    %871 = vmatprep.subr.bf16.mxu0 0
    %872 = vmatpush1.bf16.msra.mxu0 0
    %873 = vmatprep.subr.bf16.mxu0 0
    %874 = vmatpush1.bf16.msra.mxu0 0
    %875 = vmatprep.subr.bf16.mxu0 0
    %876 = vmatpush1.bf16.msra.mxu0 0
    %877 = vmatprep.subr.bf16.mxu0 0
    %878 = vmatpush1.bf16.msra.mxu0 0
    %879 = vmatprep.subr.bf16.mxu0 0
    %880 = vmatpush1.bf16.msra.mxu0 0
    %881 = vmatprep.subr.bf16.mxu0 0
    %882 = vmatpush1.bf16.msra.mxu0 0
    %883 = vmatprep.subr.bf16.mxu0 0
    %884 = vmatpush1.bf16.msra.mxu0 0
    %885 = vmatprep.subr.bf16.mxu0 0
    %886 = vmatpush1.bf16.msra.mxu0 0
    %887 = vmatprep.subr.bf16.mxu0 0
    %888 = vmatpush1.bf16.msra.mxu0 0
    %889 = vmatprep.subr.bf16.mxu0 0
    %890 = vmatpush1.bf16.msra.mxu0 0
    %891 = vmatprep.mubr.bf16.mxu0 0
    %892 = vmatmul.mubr.bf16.gmra.mrb[0].mxu0 %v734
    %v893 = vpop.f32.mrb[0].mxu0
    %v894 = vadd.f32 %v853, %v893
    %v895 = vpop.f32.mrb[0].mxu0
    %v896 = vadd.f32 %v855, %v895
    %v897 = vpop.f32.mrb[0].mxu0
    %v898 = vpop.f32.mrb[0].mxu0
    %899 = vdwg.mxu0
    %v900 = vmax.f32 %v894, 0.0
    %v901 = vmax.f32 %v896, 0.0
    %v902 = vpack.c.bf16 %v900, %v900
    %v903 = vpack.c.bf16 %v901, %v901
    %v904 = vld [vmem:[#allocation7] sm:$0xf]
    %v905 = vld [vmem:[#allocation7 + $0x4] sm:$0xf]
    %v906 = vld [vmem:[#allocation7 + $0x8] sm:$0xf]
    %v907 = vld [vmem:[#allocation7 + $0xc] sm:$0xf]
    %v908 = vld [vmem:[#allocation7 + $0x10] sm:$0xf]
    %v909 = vld [vmem:[#allocation7 + $0x14] sm:$0xf]
    %v910 = vld [vmem:[#allocation7 + $0x18] sm:$0xf]
    %v911 = vld [vmem:[#allocation7 + $0x1c] sm:$0xf]
    %v912 = vld [vmem:[#allocation7 + $0x20] sm:$0xf]
    %v913 = vld [vmem:[#allocation7 + $0x24] sm:$0xf]
    %v914 = vld [vmem:[#allocation7 + $0x28] sm:$0xf]
    %v915 = vld [vmem:[#allocation7 + $0x2c] sm:$0xf]
    %v916 = vld [vmem:[#allocation7 + $0x30] sm:$0xf]
    %v917 = vld [vmem:[#allocation7 + $0x34] sm:$0xf]
    %v918 = vld [vmem:[#allocation7 + $0x38] sm:$0xf]
    %v919 = vld [vmem:[#allocation7 + $0x3c] sm:$0xf]
    %v920 = vld [vmem:[#allocation7 + $0x40] sm:$0xf]
    %v921 = vld [vmem:[#allocation7 + $0x44] sm:$0xf]
    %v922 = vld [vmem:[#allocation7 + $0x48] sm:$0xf]
    %v923 = vld [vmem:[#allocation7 + $0x4c] sm:$0xf]
    %v924 = vld [vmem:[#allocation7 + $0x50] sm:$0xf]
    %v925 = vld [vmem:[#allocation7 + $0x54] sm:$0xf]
    %v926 = vld [vmem:[#allocation7 + $0x58] sm:$0xf]
    %v927 = vld [vmem:[#allocation7 + $0x5c] sm:$0xf]
    %v928 = vld [vmem:[#allocation7 + $0x60] sm:$0xf]
    %v929 = vld [vmem:[#allocation7 + $0x64] sm:$0xf]
    %v930 = vld [vmem:[#allocation7 + $0x68] sm:$0xf]
    %v931 = vld [vmem:[#allocation7 + $0x6c] sm:$0xf]
    %v932 = vld [vmem:[#allocation7 + $0x70] sm:$0xf]
    %v933 = vld [vmem:[#allocation7 + $0x74] sm:$0xf]
    %v934 = vld [vmem:[#allocation7 + $0x78] sm:$0xf]
    %v935 = vld [vmem:[#allocation7 + $0x7c] sm:$0xf]
    %v936 = vld [vmem:[%s4] sm:$0x1]
    %v938 = vlaneseq
    %v939 = vshrl.u32 %v938, 7
    %v940 = vsub.s32 0, %v939
    %v941 = vrot.slane %v936, %v940
    %v975 = vunpack.c.l.b16 %v904
    %v976 = vunpack.c.l.b16 %v905
    %v977 = vunpack.c.l.b16 %v906
    %v978 = vunpack.c.l.b16 %v907
    %v979 = vunpack.c.l.b16 %v908
    %v980 = vunpack.c.l.b16 %v909
    %v981 = vunpack.c.l.b16 %v910
    %v982 = vunpack.c.l.b16 %v911
    %v983 = vunpack.c.l.b16 %v912
    %v984 = vunpack.c.l.b16 %v913
    %v985 = vunpack.c.l.b16 %v914
    %v986 = vunpack.c.l.b16 %v915
    %v987 = vunpack.c.l.b16 %v916
    %v988 = vunpack.c.l.b16 %v917
    %v989 = vunpack.c.l.b16 %v918
    %v990 = vunpack.c.l.b16 %v919
    %v991 = vunpack.c.l.b16 %v920
    %v992 = vunpack.c.l.b16 %v921
    %v993 = vunpack.c.l.b16 %v922
    %v994 = vunpack.c.l.b16 %v923
    %v995 = vunpack.c.l.b16 %v924
    %v996 = vunpack.c.l.b16 %v925
    %v997 = vunpack.c.l.b16 %v926
    %v998 = vunpack.c.l.b16 %v927
    %v999 = vunpack.c.l.b16 %v928
    %v1000 = vunpack.c.l.b16 %v929
    %v1001 = vunpack.c.l.b16 %v930
    %v1002 = vunpack.c.l.b16 %v931
    %v1003 = vunpack.c.l.b16 %v932
    %v1004 = vunpack.c.l.b16 %v933
    %v1005 = vunpack.c.l.b16 %v934
    %v1006 = vunpack.c.l.b16 %v935
    %v1007 = vpack.c.b16 %v976, %v975
    %v1008 = vpack.c.b16 %v978, %v977
    %v1009 = vpack.c.b16 %v980, %v979
    %v1010 = vpack.c.b16 %v982, %v981
    %v1011 = vpack.c.b16 %v984, %v983
    %v1012 = vpack.c.b16 %v986, %v985
    %v1013 = vpack.c.b16 %v988, %v987
    %v1014 = vpack.c.b16 %v990, %v989
    %v1015 = vpack.c.b16 %v992, %v991
    %v1016 = vpack.c.b16 %v994, %v993
    %v1017 = vpack.c.b16 %v996, %v995
    %v1018 = vpack.c.b16 %v998, %v997
    %v1019 = vpack.c.b16 %v1000, %v999
    %v1020 = vpack.c.b16 %v1002, %v1001
    %v1021 = vpack.c.b16 %v1004, %v1003
    %v1022 = vpack.c.b16 %v1006, %v1005
    %1039 = vmatprep.subr.bf16.mxu0 0
    %1040 = vmatpush1.bf16.msra.mxu0 %v1007
    %1041 = vmatprep.subr.bf16.mxu0 0
    %1042 = vmatpush1.bf16.msra.mxu0 %v1008
    %1043 = vmatprep.subr.bf16.mxu0 0
    %1044 = vmatpush1.bf16.msra.mxu0 %v1009
    %1045 = vmatprep.subr.bf16.mxu0 0
    %1046 = vmatpush1.bf16.msra.mxu0 %v1010
    %1047 = vmatprep.subr.bf16.mxu0 0
    %1048 = vmatpush1.bf16.msra.mxu0 %v1011
    %1049 = vmatprep.subr.bf16.mxu0 0
    %1050 = vmatpush1.bf16.msra.mxu0 %v1012
    %1051 = vmatprep.subr.bf16.mxu0 0
    %1052 = vmatpush1.bf16.msra.mxu0 %v1013
    %1053 = vmatprep.subr.bf16.mxu0 0
    %1054 = vmatpush1.bf16.msra.mxu0 %v1014
    %1055 = vmatprep.subr.bf16.mxu0 0
    %1056 = vmatpush1.bf16.msra.mxu0 %v1015
    %1057 = vmatprep.subr.bf16.mxu0 0
    %1058 = vmatpush1.bf16.msra.mxu0 %v1016
    %1059 = vmatprep.subr.bf16.mxu0 0
    %1060 = vmatpush1.bf16.msra.mxu0 %v1017
    %1061 = vmatprep.subr.bf16.mxu0 0
    %1062 = vmatpush1.bf16.msra.mxu0 %v1018
    %1063 = vmatprep.subr.bf16.mxu0 0
    %1064 = vmatpush1.bf16.msra.mxu0 %v1019
    %1065 = vmatprep.subr.bf16.mxu0 0
    %1066 = vmatpush1.bf16.msra.mxu0 %v1020
    %1067 = vmatprep.subr.bf16.mxu0 0
    %1068 = vmatpush1.bf16.msra.mxu0 %v1021
    %1069 = vmatprep.subr.bf16.mxu0 0
    %1070 = vmatpush1.bf16.msra.mxu0 %v1022
    %1071 = vmatprep.mubr.bf16.mxu0 %v903
    %1072 = vmatmul.mubr.bf16.gmra.mrb[0].mxu0 %v902
    %v1073 = vpop.f32.mrb[0].mxu0
    %v1074 = vadd.f32 %v941, %v1073
    %v1075 = vpop.f32.mrb[0].mxu0
    %v1076 = vpop.f32.mrb[0].mxu0
    %v1077 = vpop.f32.mrb[0].mxu0
    %1078 = vdwg.mxu0
    %v1079 = vmax.f32 %v1074, 0.0
    %v1080 = vpack.c.bf16 %v1079, %v1079
    %v1081 = vld [vmem:[#allocation8] sm:$0xf]
    %v1082 = vld [vmem:[#allocation8 + $0x4] sm:$0xf]
    %v1083 = vld [vmem:[#allocation8 + $0x8] sm:$0xf]
    %v1084 = vld [vmem:[#allocation8 + $0xc] sm:$0xf]
    %v1085 = vld [vmem:[#allocation8 + $0x10] sm:$0xf]
    %v1086 = vld [vmem:[#allocation8 + $0x14] sm:$0xf]
    %v1087 = vld [vmem:[#allocation8 + $0x18] sm:$0xf]
    %v1088 = vld [vmem:[#allocation8 + $0x1c] sm:$0xf]
    %v1089 = vld [vmem:[#allocation8 + $0x20] sm:$0xf]
    %v1090 = vld [vmem:[#allocation8 + $0x24] sm:$0xf]
    %v1091 = vld [vmem:[#allocation8 + $0x28] sm:$0xf]
    %v1092 = vld [vmem:[#allocation8 + $0x2c] sm:$0xf]
    %v1093 = vld [vmem:[#allocation8 + $0x30] sm:$0xf]
    %v1094 = vld [vmem:[#allocation8 + $0x34] sm:$0xf]
    %v1095 = vld [vmem:[#allocation8 + $0x38] sm:$0xf]
    %v1096 = vld [vmem:[#allocation8 + $0x3c] sm:$0xf]
    %v1097 = vld [vmem:[%s6] sm:$0x1]
    %v1099 = vlaneseq
    %v1100 = vshrl.u32 %v1099, 7
    %v1101 = vsub.s32 0, %v1100
    %v1102 = vrot.slane %v1097, %v1101
    %v1120 = vunpack.c.l.b16 %v1081
    %v1121 = vunpack.c.l.b16 %v1082
    %v1122 = vunpack.c.l.b16 %v1083
    %v1123 = vunpack.c.l.b16 %v1084
    %v1124 = vunpack.c.l.b16 %v1085
    %v1125 = vunpack.c.l.b16 %v1086
    %v1126 = vunpack.c.l.b16 %v1087
    %v1127 = vunpack.c.l.b16 %v1088
    %v1128 = vunpack.c.l.b16 %v1089
    %v1129 = vunpack.c.l.b16 %v1090
    %v1130 = vunpack.c.l.b16 %v1091
    %v1131 = vunpack.c.l.b16 %v1092
    %v1132 = vunpack.c.l.b16 %v1093
    %v1133 = vunpack.c.l.b16 %v1094
    %v1134 = vunpack.c.l.b16 %v1095
    %v1135 = vunpack.c.l.b16 %v1096
    %v1136 = vpack.c.b16 %v1121, %v1120
    %v1137 = vpack.c.b16 %v1123, %v1122
    %v1138 = vpack.c.b16 %v1125, %v1124
    %v1139 = vpack.c.b16 %v1127, %v1126
    %v1140 = vpack.c.b16 %v1129, %v1128
    %v1141 = vpack.c.b16 %v1131, %v1130
    %v1142 = vpack.c.b16 %v1133, %v1132
    %v1143 = vpack.c.b16 %v1135, %v1134
    %1152 = vmatprep.subr.bf16.mxu0 0
    %1153 = vmatpush1.bf16.msra.mxu0 %v1136
    %1154 = vmatprep.subr.bf16.mxu0 0
    %1155 = vmatpush1.bf16.msra.mxu0 %v1137
    %1156 = vmatprep.subr.bf16.mxu0 0
    %1157 = vmatpush1.bf16.msra.mxu0 %v1138
    %1158 = vmatprep.subr.bf16.mxu0 0
    %1159 = vmatpush1.bf16.msra.mxu0 %v1139
    %1160 = vmatprep.subr.bf16.mxu0 0
    %1161 = vmatpush1.bf16.msra.mxu0 %v1140
    %1162 = vmatprep.subr.bf16.mxu0 0
    %1163 = vmatpush1.bf16.msra.mxu0 %v1141
    %1164 = vmatprep.subr.bf16.mxu0 0
    %1165 = vmatpush1.bf16.msra.mxu0 %v1142
    %1166 = vmatprep.subr.bf16.mxu0 0
    %1167 = vmatpush1.bf16.msra.mxu0 %v1143
    %1168 = vmatprep.subr.bf16.mxu0 0
    %1169 = vmatpush1.bf16.msra.mxu0 0
    %1170 = vmatprep.subr.bf16.mxu0 0
    %1171 = vmatpush1.bf16.msra.mxu0 0
    %1172 = vmatprep.subr.bf16.mxu0 0
    %1173 = vmatpush1.bf16.msra.mxu0 0
    %1174 = vmatprep.subr.bf16.mxu0 0
    %1175 = vmatpush1.bf16.msra.mxu0 0
    %1176 = vmatprep.subr.bf16.mxu0 0
    %1177 = vmatpush1.bf16.msra.mxu0 0
    %1178 = vmatprep.subr.bf16.mxu0 0
    %1179 = vmatpush1.bf16.msra.mxu0 0
    %1180 = vmatprep.subr.bf16.mxu0 0
    %1181 = vmatpush1.bf16.msra.mxu0 0
    %1182 = vmatprep.subr.bf16.mxu0 0
    %1183 = vmatpush1.bf16.msra.mxu0 0
    %1184 = vmatprep.mubr.bf16.mxu0 0
    %1185 = vmatmul.mubr.bf16.gmra.mrb[0].mxu0 %v1080
    %v1186 = vpop.f32.mrb[0].mxu0
    %v1187 = vadd.f32 %v1102, %v1186
    %v1188 = vpop.f32.mrb[0].mxu0
    %v1189 = vpop.f32.mrb[0].mxu0
    %v1190 = vpop.f32.mrb[0].mxu0
    %1191 = vdwg.mxu0
    %v1192 = vpack.c.bf16 %v1187, %v1187
    %1193 = vst [vmem:[#allocation10] sm:$0x1] %v1192
    // Predicated region
    $region46: #{tpu_custom_call.1} parent=1 // pred_check
      _
    $region47: #{tpu_custom_call.1} parent=1 // pred_check_branch
      %1195 = sbr.rel (0) target = $region49
    $region48: #{tpu_custom_call.1} parent=1 // pred_region
      %s1197 = ssub.s32 16, 16
      %1198 = vsyncadd [#allocation4], %s1197
      %s1200 = sshll.u32 [#allocation10], 4
      %s1201 = int_to_ptr.vmem [resolvable:$true] %s1200
      %1203 = dma.vmem_to_hbm [thread:$0]  %s1201, 16, %s7, [#allocation4]
    $region49: #{tpu_custom_call.1} parent=1 // pred_fallthru
      _
    // Predicated region
    $region50: #{tpu_custom_call.1} parent=1 // pred_check
      _
    $region51: #{tpu_custom_call.1} parent=1 // pred_check_branch
      %1205 = sbr.rel (0) target = $region53
    $region52: #{tpu_custom_call.1} parent=1 // pred_region
      %1206 = dma.done [#allocation4], 16
    $region53: #{tpu_custom_call.1} parent=1 // pred_fallthru
      _
    %1207 = vsyncpa [#allocation3], 1
    %1208 = vsyncpa [#allocation6], 1
    %1209 = vsyncpa [#allocation9], 1
    %1210 = vsyncpa [#allocation4], 1

</llo_original>
